<compile_context>
chip_gen: v6e
topology: v6e:2x2x1
jax: 0.10.0
libtpu: 0.0.40
codegen_flags: <defaults>
</compile_context>

<pallas_src>
import jax
import jax.numpy as jnp
from jax.experimental import pallas as pl
from jax.experimental.pallas import tpu as pltpu

F_IN, F1, F2, F3, F_OUT = 100, 80, 87, 94, 100
FPAD = 128            # padded feature width (lane-dense MXU tiles)
MAX_TILE_B = 1024     # rows per grid step (sweep 512/1024/2048; VMEM-safe)


def _cdiv(a, b):
    return (a + b - 1) // b


def _round_up(n, m):
    return ((n + m - 1) // m) * m


def _pad2(a, rows, cols):
    return jnp.pad(a, ((0, rows - a.shape[0]), (0, cols - a.shape[1])))


def prep_params(params):
    """One-time transform:
       * fuse fc1 (no bias, no activation) into fc2:  W12 = fc1_w.T @ fc2_w.T  (f32)
       * transpose remaining [out,in] weights to [in,out]
       * zero-pad everything to 128 lanes, cast weights to bf16 (biases stay f32).
    """
    bf = jnp.bfloat16
    w12 = jnp.dot(params["fc1_w"].T, params["fc2_w"].T)            # [100, 87] f32
    w12 = _pad2(w12, FPAD, FPAD).astype(bf)                        # [128, 128] bf16
    w3 = _pad2(params["fc3_w"].T, FPAD, FPAD).astype(bf)
    w4 = _pad2(params["fc4_w"].T, FPAD, FPAD).astype(bf)
    b2 = jnp.pad(params["fc2_b"], (0, FPAD - F2)).reshape(1, FPAD).astype(jnp.float32)
    b3 = jnp.pad(params["fc3_b"], (0, FPAD - F3)).reshape(1, FPAD).astype(jnp.float32)
    b4 = jnp.pad(params["fc4_b"], (0, FPAD - F_OUT)).reshape(1, FPAD).astype(jnp.float32)
    return (w12, b2, w3, b3, w4, b4)


def _mlp_kernel(x_ref, w12_ref, b2_ref, w3_ref, b3_ref, w4_ref, b4_ref, o_ref):
    bf = jnp.bfloat16
    tb = x_ref.shape[0]

    # In-kernel cast + lane-pad (avoids a dedicated pad/cast HBM pass in the
    # wrapper).  Padded lanes multiply zero weight rows, so any value would be
    # safe; zeros keep it exact.
    x = x_ref[...].astype(bf)                                            # [TB,100] bf16
    x = jnp.concatenate([x, jnp.zeros((tb, FPAD - F_IN), bf)], axis=-1)  # [TB,128]

    # fused fc1·fc2 + bias + ReLU   (bf16 x bf16 -> f32 accumulate)
    h = jnp.dot(x, w12_ref[...], preferred_element_type=jnp.float32) + b2_ref[...]
    h = jnp.maximum(h, 0.0)

    # fc3 + ReLU
    h = jnp.dot(h.astype(bf), w3_ref[...],
                preferred_element_type=jnp.float32) + b3_ref[...]
    h = jnp.maximum(h, 0.0)

    # fc4 + ReLU
    h = jnp.dot(h.astype(bf), w4_ref[...],
                preferred_element_type=jnp.float32) + b4_ref[...]
    h = jnp.maximum(h, 0.0)

    o_ref[...] = h[:, :F_OUT].astype(o_ref.dtype)                        # [TB,100] f32


def _choose_tiling(batch):
    # Tile-count-first selection (bounds batch-padding waste), then force an
    # even tile count >= 2 so both v7x TensorCores get work.
    n_tiles = max(2, _cdiv(batch, MAX_TILE_B))
    n_tiles += n_tiles % 2
    tile_b = _round_up(_cdiv(batch, n_tiles), 16)   # bf16 sublane packing
    b_pad = tile_b * n_tiles
    return tile_b, b_pad, n_tiles


@jax.jit
def net_forward(x, prepped):
    """x: [B, 100] float32. prepped: output of prep_params(). Returns [B, 100] f32."""
    B = x.shape[0]
    w12, b2, w3, b3, w4, b4 = prepped

    tile_b, b_pad, n_tiles = _choose_tiling(B)

    # Only the batch dim is padded (identity / elided when B == b_pad).
    x_p = jnp.pad(x, ((0, b_pad - B), (0, 0)))

    in_spec = pl.BlockSpec((tile_b, F_IN), lambda i: (i, 0))
    out_spec = pl.BlockSpec((tile_b, F_OUT), lambda i: (i, 0))
    w_spec = pl.BlockSpec((FPAD, FPAD), lambda i: (0, 0))   # VMEM-resident weights
    b_spec = pl.BlockSpec((1, FPAD), lambda i: (0, 0))      # VMEM-resident biases

    flops = 2 * B * (F_IN * F2 + F2 * F3 + F3 * F_OUT)
    bytes_accessed = (B * F_IN * 4                           # f32 activations in
                      + 3 * FPAD * FPAD * 2 + 3 * FPAD * 4   # weights + biases
                      + b_pad * F_OUT * 4)                   # f32 output

    out = pl.pallas_call(
        _mlp_kernel,
        out_shape=jax.ShapeDtypeStruct((b_pad, F_OUT), jnp.float32),
        grid_spec=pltpu.PrefetchScalarGridSpec(
            num_scalar_prefetch=0,
            grid=(n_tiles,),
            in_specs=[in_spec, w_spec, b_spec, w_spec, b_spec, w_spec, b_spec],
            out_specs=out_spec,
        ),
        compiler_params=pltpu.CompilerParams(
            dimension_semantics=("parallel",)),
        cost_estimate=pl.CostEstimate(
            flops=flops, transcendentals=0, bytes_accessed=bytes_accessed),
    )(x_p, w12, b2, w3, b3, w4, b4)

    return out[:B]


def init_params(key):
    """Deterministic synthetic init matching the module's shapes.
    fc1: normal(mean=0, std=1) as in the reference; others: small normals."""
    k1, k2, k3, k4, k5, k6, k7 = jax.random.split(key, 7)
    return {
        "fc1_w": jax.random.normal(k1, (F1, F_IN), jnp.float32),             # std=1
        "fc2_w": jax.random.normal(k2, (F2, F1), jnp.float32) * (1.0 / F1) ** 0.5,
        "fc2_b": jax.random.normal(k3, (F2,), jnp.float32) * 0.01,
        "fc3_w": jax.random.normal(k4, (F3, F2), jnp.float32) * (1.0 / F2) ** 0.5,
        "fc3_b": jax.random.normal(k5, (F3,), jnp.float32) * 0.01,
        "fc4_w": jax.random.normal(k6, (F_OUT, F3), jnp.float32) * (1.0 / F3) ** 0.5,
        "fc4_b": jax.random.normal(k7, (F_OUT,), jnp.float32) * 0.01,
    }


def _reference_forward_f32(x, params):
    # Pure f32 JAX mirror of the PyTorch forward (4 separate layers).
    h = x @ params["fc1_w"].T
    h = jnp.maximum(h @ params["fc2_w"].T + params["fc2_b"], 0.0)
    h = jnp.maximum(h @ params["fc3_w"].T + params["fc3_b"], 0.0)
    h = jnp.maximum(h @ params["fc4_w"].T + params["fc4_b"], 0.0)
    return h


def _reference_forward_matched(x, prepped):
    # Mirrors the kernel's numerics exactly: same fused/padded bf16 weights,
    # bf16 matmul inputs, f32 accumulation, f32 bias/ReLU.
    bf = jnp.bfloat16
    w12, b2, w3, b3, w4, b4 = prepped
    xp = jnp.pad(x, ((0, 0), (0, FPAD - F_IN))).astype(bf)
    h = jnp.maximum(jnp.dot(xp, w12, preferred_element_type=jnp.float32) + b2, 0.0)
    h = jnp.maximum(jnp.dot(h.astype(bf), w3, preferred_element_type=jnp.float32) + b3, 0.0)
    h = jnp.maximum(jnp.dot(h.astype(bf), w4, preferred_element_type=jnp.float32) + b4, 0.0)
    return h[:, :F_OUT]


if __name__ == "__main__":
    key = jax.random.PRNGKey(0)
    kp, kx = jax.random.split(key)
    params = init_params(kp)
    prepped = prep_params(params)          # one-time param prep (fuse + pad + bf16)

    B = 8
    x = jax.random.normal(kx, (B, F_IN), jnp.float32)

    out = net_forward(x, prepped)
    out = jax.block_until_ready(out)
    assert out.shape == (B, F_OUT), out.shape

    # Primary check: match the kernel-numerics (fused bf16 weights, f32 accum).
    ref_matched = _reference_forward_matched(x, prepped)
    assert jnp.allclose(out, ref_matched, atol=1e-2, rtol=1e-2), \
        "mismatch vs numerics-matched JAX reference"

    # Sanity check vs the full-f32 PyTorch-semantics reference (bf16 weights /
    # activations introduce small relative error on O(10) activations).
    ref_f32 = _reference_forward_f32(x, params)
    max_abs = float(jnp.max(jnp.abs(out - ref_f32)))
    assert max_abs < 0.5, f"unexpectedly large deviation from f32 reference: {max_abs}"

    print("KERNEL_OK")
</pallas_src>

<mosaic_0001>
module attributes {stable_mosaic.version = 11 : i64} {
  func.func @_mlp_kernel(%arg0: i32, %arg1: memref<16x100xf32, #tpu.memory_space<vmem>>, %arg2: memref<128x128xbf16, #tpu.memory_space<vmem>>, %arg3: memref<1x128xf32, #tpu.memory_space<vmem>>, %arg4: memref<128x128xbf16, #tpu.memory_space<vmem>>, %arg5: memref<1x128xf32, #tpu.memory_space<vmem>>, %arg6: memref<128x128xbf16, #tpu.memory_space<vmem>>, %arg7: memref<1x128xf32, #tpu.memory_space<vmem>>, %arg8: memref<16x100xf32, #tpu.memory_space<vmem>>) attributes {dimension_semantics = [#tpu.dimension_semantics<parallel>], iteration_bounds = array<i64: 2>, scalar_prefetch = 0 : i64, scratch_operands = 0 : i64, tpu.core_type = #tpu.core_type<tc>, window_params = [{transform_indices = @transform_0, window_bounds = array<i64: 16, 100>}, {pipeline_mode = #tpu.pipeline_mode<synchronous>, transform_indices = @transform_1, window_bounds = array<i64: 128, 128>}, {pipeline_mode = #tpu.pipeline_mode<synchronous>, transform_indices = @transform_2, window_bounds = array<i64: 1, 128>}, {pipeline_mode = #tpu.pipeline_mode<synchronous>, transform_indices = @transform_3, window_bounds = array<i64: 128, 128>}, {pipeline_mode = #tpu.pipeline_mode<synchronous>, transform_indices = @transform_4, window_bounds = array<i64: 1, 128>}, {pipeline_mode = #tpu.pipeline_mode<synchronous>, transform_indices = @transform_5, window_bounds = array<i64: 128, 128>}, {pipeline_mode = #tpu.pipeline_mode<synchronous>, transform_indices = @transform_6, window_bounds = array<i64: 1, 128>}, {transform_indices = @transform_7, window_bounds = array<i64: 16, 100>}]} {
    %c0 = arith.constant 0 : index
    %c0_0 = arith.constant 0 : index
    %0 = vector.load %arg1[%c0, %c0_0] : memref<16x100xf32, #tpu.memory_space<vmem>>, vector<16x100xf32>
    %1 = arith.truncf %0 : vector<16x100xf32> to vector<16x100xbf16>
    %cst = arith.constant 0.000000e+00 : bf16
    %2 = vector.broadcast %cst : bf16 to vector<16x28xbf16>
    %3 = tpu.concatenate %1, %2 in 1 : vector<16x100xbf16>, vector<16x28xbf16> -> vector<16x128xbf16>
    %c0_1 = arith.constant 0 : index
    %c0_2 = arith.constant 0 : index
    %4 = vector.load %arg2[%c0_1, %c0_2] : memref<128x128xbf16, #tpu.memory_space<vmem>>, vector<128x128xbf16>
    %cst_3 = arith.constant dense<0.000000e+00> : vector<16x128xf32>
    %5 = tpu.matmul %3, %4, %cst_3 {dimension_numbers = #tpu.dot_dimension_numbers<[1], [0], [0], [1], [0, 0, 1, 1], [], []>} : vector<16x128xbf16>, vector<128x128xbf16>, vector<16x128xf32> -> vector<16x128xf32>
    %c0_4 = arith.constant 0 : index
    %c0_5 = arith.constant 0 : index
    %6 = vector.load %arg3[%c0_4, %c0_5] : memref<1x128xf32, #tpu.memory_space<vmem>>, vector<1x128xf32>
    %7 = vector.broadcast %6 : vector<1x128xf32> to vector<16x128xf32>
    %8 = arith.addf %5, %7 : vector<16x128xf32>
    %cst_6 = arith.constant 0.000000e+00 : f32
    %9 = vector.broadcast %cst_6 : f32 to vector<16x128xf32>
    %10 = arith.maximumf %8, %9 : vector<16x128xf32>
    %11 = arith.truncf %10 : vector<16x128xf32> to vector<16x128xbf16>
    %c0_7 = arith.constant 0 : index
    %c0_8 = arith.constant 0 : index
    %12 = vector.load %arg4[%c0_7, %c0_8] : memref<128x128xbf16, #tpu.memory_space<vmem>>, vector<128x128xbf16>
    %cst_9 = arith.constant dense<0.000000e+00> : vector<16x128xf32>
    %13 = tpu.matmul %11, %12, %cst_9 {dimension_numbers = #tpu.dot_dimension_numbers<[1], [0], [0], [1], [0, 0, 1, 1], [], []>} : vector<16x128xbf16>, vector<128x128xbf16>, vector<16x128xf32> -> vector<16x128xf32>
    %c0_10 = arith.constant 0 : index
    %c0_11 = arith.constant 0 : index
    %14 = vector.load %arg5[%c0_10, %c0_11] : memref<1x128xf32, #tpu.memory_space<vmem>>, vector<1x128xf32>
    %15 = vector.broadcast %14 : vector<1x128xf32> to vector<16x128xf32>
    %16 = arith.addf %13, %15 : vector<16x128xf32>
    %cst_12 = arith.constant 0.000000e+00 : f32
    %17 = vector.broadcast %cst_12 : f32 to vector<16x128xf32>
    %18 = arith.maximumf %16, %17 : vector<16x128xf32>
    %19 = arith.truncf %18 : vector<16x128xf32> to vector<16x128xbf16>
    %c0_13 = arith.constant 0 : index
    %c0_14 = arith.constant 0 : index
    %20 = vector.load %arg6[%c0_13, %c0_14] : memref<128x128xbf16, #tpu.memory_space<vmem>>, vector<128x128xbf16>
    %cst_15 = arith.constant dense<0.000000e+00> : vector<16x128xf32>
    %21 = tpu.matmul %19, %20, %cst_15 {dimension_numbers = #tpu.dot_dimension_numbers<[1], [0], [0], [1], [0, 0, 1, 1], [], []>} : vector<16x128xbf16>, vector<128x128xbf16>, vector<16x128xf32> -> vector<16x128xf32>
    %c0_16 = arith.constant 0 : index
    %c0_17 = arith.constant 0 : index
    %22 = vector.load %arg7[%c0_16, %c0_17] : memref<1x128xf32, #tpu.memory_space<vmem>>, vector<1x128xf32>
    %23 = vector.broadcast %22 : vector<1x128xf32> to vector<16x128xf32>
    %24 = arith.addf %21, %23 : vector<16x128xf32>
    %cst_18 = arith.constant 0.000000e+00 : f32
    %25 = vector.broadcast %cst_18 : f32 to vector<16x128xf32>
    %26 = arith.maximumf %24, %25 : vector<16x128xf32>
    %27 = vector.extract_strided_slice %26 {offsets = [0, 0], sizes = [16, 100], strides = [1, 1]} : vector<16x128xf32> to vector<16x100xf32>
    %c0_19 = arith.constant 0 : index
    %c0_20 = arith.constant 0 : index
    %28 = vector.load %arg8[%c0_19, %c0_20] : memref<16x100xf32, #tpu.memory_space<vmem>>, vector<16x100xf32>
    tpu.vector_store %arg8[%c0_19, %c0_20], %27 {strides = array<i32>} : memref<16x100xf32, #tpu.memory_space<vmem>>, vector<16x100xf32>,
    return
  }
  func.func @transform_0(%arg0: i32) -> (i32, i32) {
    %c0_i32 = arith.constant 0 : i32
    %c0_i32_0 = arith.constant 0 : i32
    return %arg0, %c0_i32 : i32, i32
  }
  func.func @transform_1(%arg0: i32) -> (i32, i32) {
    %c0_i32 = arith.constant 0 : i32
    %c0_i32_0 = arith.constant 0 : i32
    %c0_i32_1 = arith.constant 0 : i32
    return %c0_i32, %c0_i32_0 : i32, i32
  }
  func.func @transform_2(%arg0: i32) -> (i32, i32) {
    %c0_i32 = arith.constant 0 : i32
    %c0_i32_0 = arith.constant 0 : i32
    %c0_i32_1 = arith.constant 0 : i32
    return %c0_i32, %c0_i32_0 : i32, i32
  }
  func.func @transform_3(%arg0: i32) -> (i32, i32) {
    %c0_i32 = arith.constant 0 : i32
    %c0_i32_0 = arith.constant 0 : i32
    %c0_i32_1 = arith.constant 0 : i32
    return %c0_i32, %c0_i32_0 : i32, i32
  }
  func.func @transform_4(%arg0: i32) -> (i32, i32) {
    %c0_i32 = arith.constant 0 : i32
    %c0_i32_0 = arith.constant 0 : i32
    %c0_i32_1 = arith.constant 0 : i32
    return %c0_i32, %c0_i32_0 : i32, i32
  }
  func.func @transform_5(%arg0: i32) -> (i32, i32) {
    %c0_i32 = arith.constant 0 : i32
    %c0_i32_0 = arith.constant 0 : i32
    %c0_i32_1 = arith.constant 0 : i32
    return %c0_i32, %c0_i32_0 : i32, i32
  }
  func.func @transform_6(%arg0: i32) -> (i32, i32) {
    %c0_i32 = arith.constant 0 : i32
    %c0_i32_0 = arith.constant 0 : i32
    %c0_i32_1 = arith.constant 0 : i32
    return %c0_i32, %c0_i32_0 : i32, i32
  }
  func.func @transform_7(%arg0: i32) -> (i32, i32) {
    %c0_i32 = arith.constant 0 : i32
    %c0_i32_0 = arith.constant 0 : i32
    return %arg0, %c0_i32 : i32, i32
  }
}

</mosaic_0001>

<llo_original>
// kernel: net_forward.1
$region0: #{net_forward.1}
  #allocation0 [shape = 'u32[]', space=smem, size = 0x4, offset = 0x4, fixed_abs, tag = 'smem constant byte address 0x4 - core index']
  #allocation1 [shape = 'u32[144,128]{1,0:T(1,128)}', space=vmem, size = 0x12000, scoped, tag = 'internal scratch']
  %s0 = inlined_call_operand.vmem [shape: f32[32,100], index: 0, kind: input, shape index: {}]
  %s1 = inlined_call_operand.hbm [shape: bf16[128,128], index: 1, kind: input, shape index: {}]
  %s2 = inlined_call_operand.vmem [shape: f32[1,128], index: 2, kind: input, shape index: {}]
  %s3 = inlined_call_operand.hbm [shape: bf16[128,128], index: 3, kind: input, shape index: {}]
  %s4 = inlined_call_operand.vmem [shape: f32[1,128], index: 4, kind: input, shape index: {}]
  %s5 = inlined_call_operand.hbm [shape: bf16[128,128], index: 5, kind: input, shape index: {}]
  %s6 = inlined_call_operand.vmem [shape: f32[1,128], index: 6, kind: input, shape index: {}]
  %s7 = inlined_call_operand.vmem [shape: f32[32,100], index: 7, kind: output, shape index: {}]
  %s8 = sld [smem:[#allocation0]]
  $region73: #{net_forward.1} parent=0
    _
  %s10 = ssub.s32 1, %s8
  %s11 = scalar_select 0, %s10, %s8
  $region1: #{net_forward.1} parent=0
    #allocation2 [shape = 'u8[32768]{0}', space=vmem, size = 0x8000, scoped, tag = 'input window, operand 1, single buffered']
    #allocation3 [shape = 's32[2]{0}', space=sflag, size = 0x8, scoped, tag = 'scoped memory for net_forward.1']
    #allocation4 [shape = 'u8[32768]{0}', space=vmem, size = 0x8000, scoped, tag = 'input window, operand 3, single buffered']
    #allocation5 [shape = 's32[1]{0}', space=sflag, size = 0x4, scoped, tag = 'scoped memory for net_forward.1']
    #allocation6 [shape = 'u8[32768]{0}', space=vmem, size = 0x8000, scoped, tag = 'input window, operand 5, single buffered']
    %12 = vsyncpa [#allocation3], 0
    %13 = vsyncpa [#allocation5], 0
    loop: start=0, step=1, limit=4
    $region2: #{net_forward.1} parent=1 // loop_pre_header
      _
    $region3: #{net_forward.1} parent=1 // loop_header
      %s15 = sphi 0, %s19
      %p16 = scmp.ge.s32.totalorder %s15, 4
      %s25 = sphi 0, %s27
      %s28 = sphi 0, %s25
      %s29 = sphi 0, %s28
      %s45 = sphi 0, %s29
      %s49 = sphi 0, %s49
      %s51 = sphi 0, %s49
      %s52 = sphi 0, %s51
      %s66 = sphi 0, %s52
      %s70 = sphi 0, %s70
      %s72 = sphi 0, %s70
      %s73 = sphi 0, %s72
      %s87 = sphi 0, %s73
      %s91 = sphi 0, %s91
      %s93 = sphi 0, %s91
      %s94 = sphi 0, %s93
      %s108 = sphi 0, %s94
      %s112 = sphi 0, %s112
      %s114 = sphi 0, %s112
      %s115 = sphi 0, %s114
      %s129 = sphi 0, %s115
      %s133 = sphi 0, %s133
      %s135 = sphi 0, %s133
      %s136 = sphi 0, %s135
      %s150 = sphi 0, %s136
      %s154 = sphi 0, %s154
      %s156 = sphi 0, %s154
      %s157 = sphi 0, %s156
      %s171 = sphi 0, %s157
      %s177 = sphi 0, %s179
      %s180 = sphi 0, %s177
      %s181 = sphi 0, %s180
      %s197 = sphi 0, %s181
    $region4: #{net_forward.1} parent=1 // loop_header_branch
      %18 = sbr.rel (%p16) target = $region8
    $region5: #{net_forward.1} parent=1 // loop_body
      %s20 = ssub.s32 %s15, 1
      %s21 = ssub.s32 %s15, 2
      %s22 = sadd.s32 %s15, 1
      %s23 = ssub.s32 %s15, %s22
      %p24 = scmp.eq.s32.totalorder %s23, 0
      %s26 = sadd.s32 %s25, 1
      %s27 = scalar_select %p24, %s25, %s26
      %p30 = pneg %p24
      %p31 = scmp.eq.s32.totalorder %s15, 1
      %p32 = por %p30, %p31
      %p33 = scmp.ne.s32.totalorder %s25, %s28
      %p34 = scmp.eq.s32.totalorder %s15, 0
      %p35 = por %p33, %p34
      %p36 = scmp.ne.s32.totalorder %s25, %s28
      %p37 = scmp.eq.s32.totalorder %s20, 1
      %p38 = por %p36, %p37
      %p39 = scmp.ne.s32.totalorder %s28, %s29
      %p40 = scmp.eq.s32.totalorder %s20, 0
      %p41 = por %p39, %p40
      %p42 = scmp.ne.s32.totalorder %s28, %s29
      %p43 = scmp.eq.s32.totalorder %s21, 1
      %p44 = por %p42, %p43
      %p46 = scmp.ne.s32.totalorder %s29, %s45
      %p47 = scmp.eq.s32.totalorder %s21, 0
      %p48 = por %p46, %p47
      %s50 = sadd.s32 %s49, 1
      %p53 = scmp.eq.s32.totalorder %s15, 1
      %p54 = scmp.ne.s32.totalorder %s49, %s51
      %p55 = scmp.eq.s32.totalorder %s15, 0
      %p56 = por %p54, %p55
      %p57 = scmp.ne.s32.totalorder %s49, %s51
      %p58 = scmp.eq.s32.totalorder %s20, 1
      %p59 = por %p57, %p58
      %p60 = scmp.ne.s32.totalorder %s51, %s52
      %p61 = scmp.eq.s32.totalorder %s20, 0
      %p62 = por %p60, %p61
      %p63 = scmp.ne.s32.totalorder %s51, %s52
      %p64 = scmp.eq.s32.totalorder %s21, 1
      %p65 = por %p63, %p64
      %p67 = scmp.ne.s32.totalorder %s52, %s66
      %p68 = scmp.eq.s32.totalorder %s21, 0
      %p69 = por %p67, %p68
      %s71 = sadd.s32 %s70, 1
      %p74 = scmp.eq.s32.totalorder %s15, 1
      %p75 = scmp.ne.s32.totalorder %s70, %s72
      %p76 = scmp.eq.s32.totalorder %s15, 0
      %p77 = por %p75, %p76
      %p78 = scmp.ne.s32.totalorder %s70, %s72
      %p79 = scmp.eq.s32.totalorder %s20, 1
      %p80 = por %p78, %p79
      %p81 = scmp.ne.s32.totalorder %s72, %s73
      %p82 = scmp.eq.s32.totalorder %s20, 0
      %p83 = por %p81, %p82
      %p84 = scmp.ne.s32.totalorder %s72, %s73
      %p85 = scmp.eq.s32.totalorder %s21, 1
      %p86 = por %p84, %p85
      %p88 = scmp.ne.s32.totalorder %s73, %s87
      %p89 = scmp.eq.s32.totalorder %s21, 0
      %p90 = por %p88, %p89
      %s92 = sadd.s32 %s91, 1
      %p95 = scmp.eq.s32.totalorder %s15, 1
      %p96 = scmp.ne.s32.totalorder %s91, %s93
      %p97 = scmp.eq.s32.totalorder %s15, 0
      %p98 = por %p96, %p97
      %p99 = scmp.ne.s32.totalorder %s91, %s93
      %p100 = scmp.eq.s32.totalorder %s20, 1
      %p101 = por %p99, %p100
      %p102 = scmp.ne.s32.totalorder %s93, %s94
      %p103 = scmp.eq.s32.totalorder %s20, 0
      %p104 = por %p102, %p103
      %p105 = scmp.ne.s32.totalorder %s93, %s94
      %p106 = scmp.eq.s32.totalorder %s21, 1
      %p107 = por %p105, %p106
      %p109 = scmp.ne.s32.totalorder %s94, %s108
      %p110 = scmp.eq.s32.totalorder %s21, 0
      %p111 = por %p109, %p110
      %s113 = sadd.s32 %s112, 1
      %p116 = scmp.eq.s32.totalorder %s15, 1
      %p117 = scmp.ne.s32.totalorder %s112, %s114
      %p118 = scmp.eq.s32.totalorder %s15, 0
      %p119 = por %p117, %p118
      %p120 = scmp.ne.s32.totalorder %s112, %s114
      %p121 = scmp.eq.s32.totalorder %s20, 1
      %p122 = por %p120, %p121
      %p123 = scmp.ne.s32.totalorder %s114, %s115
      %p124 = scmp.eq.s32.totalorder %s20, 0
      %p125 = por %p123, %p124
      %p126 = scmp.ne.s32.totalorder %s114, %s115
      %p127 = scmp.eq.s32.totalorder %s21, 1
      %p128 = por %p126, %p127
      %p130 = scmp.ne.s32.totalorder %s115, %s129
      %p131 = scmp.eq.s32.totalorder %s21, 0
      %p132 = por %p130, %p131
      %s134 = sadd.s32 %s133, 1
      %p137 = scmp.eq.s32.totalorder %s15, 1
      %p138 = scmp.ne.s32.totalorder %s133, %s135
      %p139 = scmp.eq.s32.totalorder %s15, 0
      %p140 = por %p138, %p139
      %p141 = scmp.ne.s32.totalorder %s133, %s135
      %p142 = scmp.eq.s32.totalorder %s20, 1
      %p143 = por %p141, %p142
      %p144 = scmp.ne.s32.totalorder %s135, %s136
      %p145 = scmp.eq.s32.totalorder %s20, 0
      %p146 = por %p144, %p145
      %p147 = scmp.ne.s32.totalorder %s135, %s136
      %p148 = scmp.eq.s32.totalorder %s21, 1
      %p149 = por %p147, %p148
      %p151 = scmp.ne.s32.totalorder %s136, %s150
      %p152 = scmp.eq.s32.totalorder %s21, 0
      %p153 = por %p151, %p152
      %s155 = sadd.s32 %s154, 1
      %p158 = scmp.eq.s32.totalorder %s15, 1
      %p159 = scmp.ne.s32.totalorder %s154, %s156
      %p160 = scmp.eq.s32.totalorder %s15, 0
      %p161 = por %p159, %p160
      %p162 = scmp.ne.s32.totalorder %s154, %s156
      %p163 = scmp.eq.s32.totalorder %s20, 1
      %p164 = por %p162, %p163
      %p165 = scmp.ne.s32.totalorder %s156, %s157
      %p166 = scmp.eq.s32.totalorder %s20, 0
      %p167 = por %p165, %p166
      %p168 = scmp.ne.s32.totalorder %s156, %s157
      %p169 = scmp.eq.s32.totalorder %s21, 1
      %p170 = por %p168, %p169
      %p172 = scmp.ne.s32.totalorder %s157, %s171
      %p173 = scmp.eq.s32.totalorder %s21, 0
      %p174 = por %p172, %p173
      %s175 = ssub.s32 %s15, %s22
      %p176 = scmp.eq.s32.totalorder %s175, 0
      %s178 = sadd.s32 %s177, 1
      %s179 = scalar_select %p176, %s177, %s178
      %p182 = pneg %p176
      %p183 = scmp.eq.s32.totalorder %s15, 1
      %p184 = por %p182, %p183
      %p185 = scmp.ne.s32.totalorder %s177, %s180
      %p186 = scmp.eq.s32.totalorder %s15, 0
      %p187 = por %p185, %p186
      %p188 = scmp.ne.s32.totalorder %s177, %s180
      %p189 = scmp.eq.s32.totalorder %s20, 1
      %p190 = por %p188, %p189
      %p191 = scmp.ne.s32.totalorder %s180, %s181
      %p192 = scmp.eq.s32.totalorder %s20, 0
      %p193 = por %p191, %p192
      %p194 = scmp.ne.s32.totalorder %s180, %s181
      %p195 = scmp.eq.s32.totalorder %s21, 1
      %p196 = por %p194, %p195
      %p198 = scmp.ne.s32.totalorder %s181, %s197
      %p199 = scmp.eq.s32.totalorder %s21, 0
      %p200 = por %p198, %p199
      %p201 = scmp.le.s32.totalorder 1, %s15
      %p202 = scmp.lt.s32.totalorder %s15, 3
      %p203 = pnand %p201, %p202
      %p204 = pneg %p203
      // Predicated region
      $region9: #{net_forward.1} parent=5 // pred_check
        _
      $region10: #{net_forward.1} parent=5 // pred_check_branch
        %206 = sbr.rel (%p203) target = $region12
      $region11: #{net_forward.1} parent=5 // pred_region
        %s207 = ssub.s32 %s15, 1
        // Predicated region
        $region13: #{net_forward.1} parent=11 // pred_check
          %p208 = pneg %p62
        $region14: #{net_forward.1} parent=11 // pred_check_branch
          %210 = sbr.rel (%p208) target = $region16
        $region15: #{net_forward.1} parent=11 // pred_region
          %s212 = ssub.s32 1024, 1024
          %213 = vsyncadd [#allocation3], %s212
          %s214 = sshll.u32 [#allocation2], 4
          %s215 = int_to_ptr.vmem [resolvable:$true] %s214
          %220 = dma.hbm_to_vmem [thread:$0]  %s1, 1024, %s215, [#allocation3], 64, 64, 4
        $region16: #{net_forward.1} parent=11 // pred_fallthru
          _
        // Predicated region
        $region17: #{net_forward.1} parent=11 // pred_check
          %p221 = pneg %p83
        $region18: #{net_forward.1} parent=11 // pred_check_branch
          %223 = sbr.rel (%p221) target = $region20
        $region19: #{net_forward.1} parent=11 // pred_region
          _
        $region20: #{net_forward.1} parent=11 // pred_fallthru
          _
        // Predicated region
        $region21: #{net_forward.1} parent=11 // pred_check
          %p224 = pneg %p104
        $region22: #{net_forward.1} parent=11 // pred_check_branch
          %226 = sbr.rel (%p224) target = $region24
        $region23: #{net_forward.1} parent=11 // pred_region
          %s228 = ssub.s32 1024, 1024
          %229 = vsyncadd [#allocation5], %s228
          %s230 = sshll.u32 [#allocation4], 4
          %s231 = int_to_ptr.vmem [resolvable:$true] %s230
          %236 = dma.hbm_to_vmem [thread:$0]  %s3, 1024, %s231, [#allocation5], 64, 64, 4
        $region24: #{net_forward.1} parent=11 // pred_fallthru
          _
        // Predicated region
        $region25: #{net_forward.1} parent=11 // pred_check
          %p237 = pneg %p125
        $region26: #{net_forward.1} parent=11 // pred_check_branch
          %239 = sbr.rel (%p237) target = $region28
        $region27: #{net_forward.1} parent=11 // pred_region
          _
        $region28: #{net_forward.1} parent=11 // pred_fallthru
          _
        // Predicated region
        $region29: #{net_forward.1} parent=11 // pred_check
          %p240 = pneg %p146
        $region30: #{net_forward.1} parent=11 // pred_check_branch
          %242 = sbr.rel (%p240) target = $region32
        $region31: #{net_forward.1} parent=11 // pred_region
          %s244 = ssub.s32 1024, 1024
          %245 = vsyncadd [#allocation5], %s244
          %s246 = sshll.u32 [#allocation6], 4
          %s247 = int_to_ptr.vmem [resolvable:$true] %s246
          %252 = dma.hbm_to_vmem [thread:$0]  %s5, 1024, %s247, [#allocation5], 64, 64, 4
        $region32: #{net_forward.1} parent=11 // pred_fallthru
          _
        // Predicated region
        $region33: #{net_forward.1} parent=11 // pred_check
          %p253 = pneg %p167
        $region34: #{net_forward.1} parent=11 // pred_check_branch
          %255 = sbr.rel (%p253) target = $region36
        $region35: #{net_forward.1} parent=11 // pred_region
          _
        $region36: #{net_forward.1} parent=11 // pred_fallthru
          _
      $region12: #{net_forward.1} parent=5 // pred_fallthru
        _
      %p256 = scmp.lt.s32.totalorder %s15, 2
      // Predicated region
      $region37: #{net_forward.1} parent=5 // pred_check
        %p257 = pneg %p256
      $region38: #{net_forward.1} parent=5 // pred_check_branch
        %259 = sbr.rel (%p257) target = $region40
      $region39: #{net_forward.1} parent=5 // pred_region
        // Predicated region
        $region41: #{net_forward.1} parent=39 // pred_check
          %p260 = pneg %p35
        $region42: #{net_forward.1} parent=39 // pred_check_branch
          %262 = sbr.rel (%p260) target = $region44
        $region43: #{net_forward.1} parent=39 // pred_region
          %s263 = smul.u32 2, %s15
          %p264 = scmp.lt.s32.totalorder %s263, 3
          %s265 = scalar_select %p264, %s263, 3
          %s266 = smul.addr %s265, 8
          %s267 = scalar_lea.vmem %s0, %s266
          %s268 = smul.u32 2, %s15
        $region44: #{net_forward.1} parent=39 // pred_fallthru
          _
      $region40: #{net_forward.1} parent=5 // pred_fallthru
        _
      %p269 = scmp.le.s32.totalorder 1, %s15
      %p270 = scmp.lt.s32.totalorder %s15, 3
      %p271 = pnand %p269, %p270
      %p272 = pneg %p271
      // Predicated region
      $region45: #{net_forward.1} parent=5 // pred_check
        _
      $region46: #{net_forward.1} parent=5 // pred_check_branch
        %274 = sbr.rel (%p271) target = $region48
      $region47: #{net_forward.1} parent=5 // pred_region
        %s275 = ssub.s32 %s15, 1
        // Predicated region
        $region49: #{net_forward.1} parent=47 // pred_check
          %p276 = pneg %p62
        $region50: #{net_forward.1} parent=47 // pred_check_branch
          %278 = sbr.rel (%p276) target = $region52
        $region51: #{net_forward.1} parent=47 // pred_region
          %279 = dma.done [#allocation3], 1024
        $region52: #{net_forward.1} parent=47 // pred_fallthru
          _
        // Predicated region
        $region53: #{net_forward.1} parent=47 // pred_check
          %p280 = pneg %p104
        $region54: #{net_forward.1} parent=47 // pred_check_branch
          %282 = sbr.rel (%p280) target = $region56
        $region55: #{net_forward.1} parent=47 // pred_region
          %283 = dma.done [#allocation5], 1024
        $region56: #{net_forward.1} parent=47 // pred_fallthru
          _
        // Predicated region
        $region57: #{net_forward.1} parent=47 // pred_check
          %p284 = pneg %p146
        $region58: #{net_forward.1} parent=47 // pred_check_branch
          %286 = sbr.rel (%p284) target = $region60
        $region59: #{net_forward.1} parent=47 // pred_region
          %287 = dma.done [#allocation5], 1024
        $region60: #{net_forward.1} parent=47 // pred_fallthru
          _
        %s288 = smul.u32 2, %s20
        %p289 = scmp.lt.s32.totalorder %s288, 3
        %s290 = scalar_select %p289, %s288, 3
        %s291 = smul.addr %s290, 8
        %s292 = scalar_lea.vmem %s0, %s291
        %p293 = pneg %p41
        %p294 = pneg %p38
        %p295 = pneg %p62
        %p296 = pneg %p59
        %p297 = pneg %p83
        %p298 = pneg %p80
        %p299 = pneg %p104
        %p300 = pneg %p101
        %p301 = pneg %p125
        %p302 = pneg %p122
        %p303 = pneg %p146
        %p304 = pneg %p143
        %p305 = pneg %p167
        %p306 = pneg %p164
        %p307 = pneg %p193
        %p308 = pneg %p190
        %s309 = smul.u32 2, %s20
        %p310 = scmp.lt.s32.totalorder %s309, 3
        %s311 = scalar_select %p310, %s309, 3
        %s312 = smul.addr %s311, 8
        %s313 = scalar_lea.vmem %s7, %s312
        %s314 = smul.u32 2, %s20
        %p315 = scmp.lt.s32.totalorder %s314, 3
        %s316 = scalar_select %p315, %s314, 3
        %s317 = smul.addr %s316, 8
        %s318 = scalar_lea.vmem %s0, %s317
        %s319 = smul.u32 2, %s20
        %s320 = smul.u32 2, %s20
        %p321 = scmp.lt.s32.totalorder %s320, 3
        %s322 = scalar_select %p321, %s320, 3
        %s323 = smul.addr %s322, 8
        %s324 = scalar_lea.vmem %s7, %s323
        %s325 = smul.u32 2, %s20
        %v327 = vld [vmem:[%s318] sm:$0xff]
        %v328 = vld [vmem:[%s318 + $0x8] sm:$0xff]
        %v329 = vpack.c.bf16 %v328, %v327
        %vm330 = vcmask 818176
        %v333 = vsel %vm330, %v329, 0
        %v335 = vld [vmem:[#allocation2] sm:$0xf]
        %v336 = vld [vmem:[#allocation2 + $0x4] sm:$0xf]
        %v337 = vld [vmem:[#allocation2 + $0x8] sm:$0xf]
        %v338 = vld [vmem:[#allocation2 + $0xc] sm:$0xf]
        %v339 = vld [vmem:[#allocation2 + $0x10] sm:$0xf]
        %v340 = vld [vmem:[#allocation2 + $0x14] sm:$0xf]
        %v341 = vld [vmem:[#allocation2 + $0x18] sm:$0xf]
        %v342 = vld [vmem:[#allocation2 + $0x1c] sm:$0xf]
        %v343 = vld [vmem:[#allocation2 + $0x20] sm:$0xf]
        %v344 = vld [vmem:[#allocation2 + $0x24] sm:$0xf]
        %v345 = vld [vmem:[#allocation2 + $0x28] sm:$0xf]
        %v346 = vld [vmem:[#allocation2 + $0x2c] sm:$0xf]
        %v347 = vld [vmem:[#allocation2 + $0x30] sm:$0xf]
        %v348 = vld [vmem:[#allocation2 + $0x34] sm:$0xf]
        %v349 = vld [vmem:[#allocation2 + $0x38] sm:$0xf]
        %v350 = vld [vmem:[#allocation2 + $0x3c] sm:$0xf]
        %v351 = vld [vmem:[%s2] sm:$0x1]
        %v353 = vlaneseq
        %v354 = vshrl.u32 %v353, 7
        %v355 = vsub.s32 0, %v354
        %v356 = vrot.slane %v351, %v355
        %v374 = vunpack.c.l.b16 %v335
        %v375 = vunpack.c.l.b16 %v336
        %v376 = vunpack.c.l.b16 %v337
        %v377 = vunpack.c.l.b16 %v338
        %v378 = vunpack.c.l.b16 %v339
        %v379 = vunpack.c.l.b16 %v340
        %v380 = vunpack.c.l.b16 %v341
        %v381 = vunpack.c.l.b16 %v342
        %v382 = vunpack.c.l.b16 %v343
        %v383 = vunpack.c.l.b16 %v344
        %v384 = vunpack.c.l.b16 %v345
        %v385 = vunpack.c.l.b16 %v346
        %v386 = vunpack.c.l.b16 %v347
        %v387 = vunpack.c.l.b16 %v348
        %v388 = vunpack.c.l.b16 %v349
        %v389 = vunpack.c.l.b16 %v350
        %v390 = vpack.c.b16 %v375, %v374
        %v391 = vpack.c.b16 %v377, %v376
        %v392 = vpack.c.b16 %v379, %v378
        %v393 = vpack.c.b16 %v381, %v380
        %v394 = vpack.c.b16 %v383, %v382
        %v395 = vpack.c.b16 %v385, %v384
        %v396 = vpack.c.b16 %v387, %v386
        %v397 = vpack.c.b16 %v389, %v388
        %406 = vmatprep.subr.bf16.mxu0 0
        %407 = vmatpush1.bf16.msra.mxu0 %v397
        %408 = vmatprep.subr.bf16.mxu0 0
        %409 = vmatpush1.bf16.msra.mxu0 %v396
        %410 = vmatprep.subr.bf16.mxu0 0
        %411 = vmatpush1.bf16.msra.mxu0 %v395
        %412 = vmatprep.subr.bf16.mxu0 0
        %413 = vmatpush1.bf16.msra.mxu0 %v394
        %414 = vmatprep.subr.bf16.mxu0 0
        %415 = vmatpush1.bf16.msra.mxu0 %v393
        %416 = vmatprep.subr.bf16.mxu0 0
        %417 = vmatpush1.bf16.msra.mxu0 %v392
        %418 = vmatprep.subr.bf16.mxu0 0
        %419 = vmatpush1.bf16.msra.mxu0 %v391
        %420 = vmatprep.subr.bf16.mxu0 0
        %421 = vmatpush1.bf16.msra.mxu0 %v390
        %422 = vmatprep.subr.bf16.mxu0 0
        %423 = vmatpush2.bf16.msra.mxu0 0
        %424 = vmatprep.subr.bf16.mxu0 0
        %425 = vmatpush2.bf16.msra.mxu0 0
        %426 = vmatprep.subr.bf16.mxu0 0
        %427 = vmatpush2.bf16.msra.mxu0 0
        %428 = vmatprep.subr.bf16.mxu0 0
        %429 = vmatpush2.bf16.msra.mxu0 0
        %430 = vmatprep.subr.bf16.mxu0 0
        %431 = vmatpush2.bf16.msra.mxu0 0
        %432 = vmatprep.subr.bf16.mxu0 0
        %433 = vmatpush2.bf16.msra.mxu0 0
        %434 = vmatprep.subr.bf16.mxu0 0
        %435 = vmatpush2.bf16.msra.mxu0 0
        %436 = vmatprep.subr.bf16.mxu0 0
        %437 = vmatpush2.bf16.msra.mxu0 0
        %438 = vmatprep.mubr.bf16.mxu0 0
        %439 = vmatmul.mubr.bf16.gmra.mxu0 %v333
        %v440 = vpop.f32.mrf.mxu0
        %v441 = vadd.f32 %v356, %v440
        %v442 = vpop.f32.mrf.mxu0
        %v443 = vpop.f32.mrf.mxu0
        %v444 = vadd.f32 %v356, %v443
        %v445 = vpop.f32.mrf.mxu0
        %446 = vdwg.mxu0
        %v447 = vmax.f32 %v441, 0.0
        %v448 = vmax.f32 %v444, 0.0
        %v449 = vpack.c.bf16 %v448, %v447
        %v450 = vld [vmem:[#allocation4] sm:$0xf]
        %v451 = vld [vmem:[#allocation4 + $0x4] sm:$0xf]
        %v452 = vld [vmem:[#allocation4 + $0x8] sm:$0xf]
        %v453 = vld [vmem:[#allocation4 + $0xc] sm:$0xf]
        %v454 = vld [vmem:[#allocation4 + $0x10] sm:$0xf]
        %v455 = vld [vmem:[#allocation4 + $0x14] sm:$0xf]
        %v456 = vld [vmem:[#allocation4 + $0x18] sm:$0xf]
        %v457 = vld [vmem:[#allocation4 + $0x1c] sm:$0xf]
        %v458 = vld [vmem:[#allocation4 + $0x20] sm:$0xf]
        %v459 = vld [vmem:[#allocation4 + $0x24] sm:$0xf]
        %v460 = vld [vmem:[#allocation4 + $0x28] sm:$0xf]
        %v461 = vld [vmem:[#allocation4 + $0x2c] sm:$0xf]
        %v462 = vld [vmem:[#allocation4 + $0x30] sm:$0xf]
        %v463 = vld [vmem:[#allocation4 + $0x34] sm:$0xf]
        %v464 = vld [vmem:[#allocation4 + $0x38] sm:$0xf]
        %v465 = vld [vmem:[#allocation4 + $0x3c] sm:$0xf]
        %v466 = vld [vmem:[%s4] sm:$0x1]
        %v468 = vlaneseq
        %v469 = vshrl.u32 %v468, 7
        %v470 = vsub.s32 0, %v469
        %v471 = vrot.slane %v466, %v470
        %v489 = vunpack.c.l.b16 %v450
        %v490 = vunpack.c.l.b16 %v451
        %v491 = vunpack.c.l.b16 %v452
        %v492 = vunpack.c.l.b16 %v453
        %v493 = vunpack.c.l.b16 %v454
        %v494 = vunpack.c.l.b16 %v455
        %v495 = vunpack.c.l.b16 %v456
        %v496 = vunpack.c.l.b16 %v457
        %v497 = vunpack.c.l.b16 %v458
        %v498 = vunpack.c.l.b16 %v459
        %v499 = vunpack.c.l.b16 %v460
        %v500 = vunpack.c.l.b16 %v461
        %v501 = vunpack.c.l.b16 %v462
        %v502 = vunpack.c.l.b16 %v463
        %v503 = vunpack.c.l.b16 %v464
        %v504 = vunpack.c.l.b16 %v465
        %v505 = vpack.c.b16 %v490, %v489
        %v506 = vpack.c.b16 %v492, %v491
        %v507 = vpack.c.b16 %v494, %v493
        %v508 = vpack.c.b16 %v496, %v495
        %v509 = vpack.c.b16 %v498, %v497
        %v510 = vpack.c.b16 %v500, %v499
        %v511 = vpack.c.b16 %v502, %v501
        %v512 = vpack.c.b16 %v504, %v503
        %521 = vmatprep.subr.bf16.mxu0 0
        %522 = vmatpush1.bf16.msra.mxu0 %v512
        %523 = vmatprep.subr.bf16.mxu0 0
        %524 = vmatpush1.bf16.msra.mxu0 %v511
        %525 = vmatprep.subr.bf16.mxu0 0
        %526 = vmatpush1.bf16.msra.mxu0 %v510
        %527 = vmatprep.subr.bf16.mxu0 0
        %528 = vmatpush1.bf16.msra.mxu0 %v509
        %529 = vmatprep.subr.bf16.mxu0 0
        %530 = vmatpush1.bf16.msra.mxu0 %v508
        %531 = vmatprep.subr.bf16.mxu0 0
        %532 = vmatpush1.bf16.msra.mxu0 %v507
        %533 = vmatprep.subr.bf16.mxu0 0
        %534 = vmatpush1.bf16.msra.mxu0 %v506
        %535 = vmatprep.subr.bf16.mxu0 0
        %536 = vmatpush1.bf16.msra.mxu0 %v505
        %537 = vmatprep.subr.bf16.mxu0 0
        %538 = vmatpush2.bf16.msra.mxu0 0
        %539 = vmatprep.subr.bf16.mxu0 0
        %540 = vmatpush2.bf16.msra.mxu0 0
        %541 = vmatprep.subr.bf16.mxu0 0
        %542 = vmatpush2.bf16.msra.mxu0 0
        %543 = vmatprep.subr.bf16.mxu0 0
        %544 = vmatpush2.bf16.msra.mxu0 0
        %545 = vmatprep.subr.bf16.mxu0 0
        %546 = vmatpush2.bf16.msra.mxu0 0
        %547 = vmatprep.subr.bf16.mxu0 0
        %548 = vmatpush2.bf16.msra.mxu0 0
        %549 = vmatprep.subr.bf16.mxu0 0
        %550 = vmatpush2.bf16.msra.mxu0 0
        %551 = vmatprep.subr.bf16.mxu0 0
        %552 = vmatpush2.bf16.msra.mxu0 0
        %553 = vmatprep.mubr.bf16.mxu0 0
        %554 = vmatmul.mubr.bf16.gmra.mxu0 %v449
        %v555 = vpop.f32.mrf.mxu0
        %v556 = vadd.f32 %v471, %v555
        %v557 = vpop.f32.mrf.mxu0
        %v558 = vpop.f32.mrf.mxu0
        %v559 = vadd.f32 %v471, %v558
        %v560 = vpop.f32.mrf.mxu0
        %561 = vdwg.mxu0
        %v562 = vmax.f32 %v556, 0.0
        %v563 = vmax.f32 %v559, 0.0
        %v564 = vpack.c.bf16 %v563, %v562
        %v565 = vld [vmem:[#allocation6] sm:$0xf]
        %v566 = vld [vmem:[#allocation6 + $0x4] sm:$0xf]
        %v567 = vld [vmem:[#allocation6 + $0x8] sm:$0xf]
        %v568 = vld [vmem:[#allocation6 + $0xc] sm:$0xf]
        %v569 = vld [vmem:[#allocation6 + $0x10] sm:$0xf]
        %v570 = vld [vmem:[#allocation6 + $0x14] sm:$0xf]
        %v571 = vld [vmem:[#allocation6 + $0x18] sm:$0xf]
        %v572 = vld [vmem:[#allocation6 + $0x1c] sm:$0xf]
        %v573 = vld [vmem:[#allocation6 + $0x20] sm:$0xf]
        %v574 = vld [vmem:[#allocation6 + $0x24] sm:$0xf]
        %v575 = vld [vmem:[#allocation6 + $0x28] sm:$0xf]
        %v576 = vld [vmem:[#allocation6 + $0x2c] sm:$0xf]
        %v577 = vld [vmem:[#allocation6 + $0x30] sm:$0xf]
        %v578 = vld [vmem:[#allocation6 + $0x34] sm:$0xf]
        %v579 = vld [vmem:[#allocation6 + $0x38] sm:$0xf]
        %v580 = vld [vmem:[#allocation6 + $0x3c] sm:$0xf]
        %v581 = vld [vmem:[%s6] sm:$0x1]
        %v583 = vlaneseq
        %v584 = vshrl.u32 %v583, 7
        %v585 = vsub.s32 0, %v584
        %v586 = vrot.slane %v581, %v585
        %v604 = vunpack.c.l.b16 %v565
        %v605 = vunpack.c.l.b16 %v566
        %v606 = vunpack.c.l.b16 %v567
        %v607 = vunpack.c.l.b16 %v568
        %v608 = vunpack.c.l.b16 %v569
        %v609 = vunpack.c.l.b16 %v570
        %v610 = vunpack.c.l.b16 %v571
        %v611 = vunpack.c.l.b16 %v572
        %v612 = vunpack.c.l.b16 %v573
        %v613 = vunpack.c.l.b16 %v574
        %v614 = vunpack.c.l.b16 %v575
        %v615 = vunpack.c.l.b16 %v576
        %v616 = vunpack.c.l.b16 %v577
        %v617 = vunpack.c.l.b16 %v578
        %v618 = vunpack.c.l.b16 %v579
        %v619 = vunpack.c.l.b16 %v580
        %v620 = vpack.c.b16 %v605, %v604
        %v621 = vpack.c.b16 %v607, %v606
        %v622 = vpack.c.b16 %v609, %v608
        %v623 = vpack.c.b16 %v611, %v610
        %v624 = vpack.c.b16 %v613, %v612
        %v625 = vpack.c.b16 %v615, %v614
        %v626 = vpack.c.b16 %v617, %v616
        %v627 = vpack.c.b16 %v619, %v618
        %636 = vmatprep.subr.bf16.mxu0 0
        %637 = vmatpush1.bf16.msra.mxu0 %v627
        %638 = vmatprep.subr.bf16.mxu0 0
        %639 = vmatpush1.bf16.msra.mxu0 %v626
        %640 = vmatprep.subr.bf16.mxu0 0
        %641 = vmatpush1.bf16.msra.mxu0 %v625
        %642 = vmatprep.subr.bf16.mxu0 0
        %643 = vmatpush1.bf16.msra.mxu0 %v624
        %644 = vmatprep.subr.bf16.mxu0 0
        %645 = vmatpush1.bf16.msra.mxu0 %v623
        %646 = vmatprep.subr.bf16.mxu0 0
        %647 = vmatpush1.bf16.msra.mxu0 %v622
        %648 = vmatprep.subr.bf16.mxu0 0
        %649 = vmatpush1.bf16.msra.mxu0 %v621
        %650 = vmatprep.subr.bf16.mxu0 0
        %651 = vmatpush1.bf16.msra.mxu0 %v620
        %652 = vmatprep.subr.bf16.mxu0 0
        %653 = vmatpush2.bf16.msra.mxu0 0
        %654 = vmatprep.subr.bf16.mxu0 0
        %655 = vmatpush2.bf16.msra.mxu0 0
        %656 = vmatprep.subr.bf16.mxu0 0
        %657 = vmatpush2.bf16.msra.mxu0 0
        %658 = vmatprep.subr.bf16.mxu0 0
        %659 = vmatpush2.bf16.msra.mxu0 0
        %660 = vmatprep.subr.bf16.mxu0 0
        %661 = vmatpush2.bf16.msra.mxu0 0
        %662 = vmatprep.subr.bf16.mxu0 0
        %663 = vmatpush2.bf16.msra.mxu0 0
        %664 = vmatprep.subr.bf16.mxu0 0
        %665 = vmatpush2.bf16.msra.mxu0 0
        %666 = vmatprep.subr.bf16.mxu0 0
        %667 = vmatpush2.bf16.msra.mxu0 0
        %668 = vmatprep.mubr.bf16.mxu0 0
        %669 = vmatmul.mubr.bf16.gmra.mxu0 %v564
        %v670 = vpop.f32.mrf.mxu0
        %v671 = vadd.f32 %v586, %v670
        %v672 = vpop.f32.mrf.mxu0
        %v673 = vpop.f32.mrf.mxu0
        %v674 = vadd.f32 %v586, %v673
        %v675 = vpop.f32.mrf.mxu0
        %676 = vdwg.mxu0
        %v677 = vmax.f32 %v671, 0.0
        %v678 = vmax.f32 %v674, 0.0
        %679 = vst.msk [vmem:[%s324] sm:$0xff] %vm330, %v677
        %680 = vst.msk [vmem:[%s324 + $0x8] sm:$0xff] %vm330, %v678
        %s681 = smul.u32 2, %s20
        %p682 = scmp.lt.s32.totalorder %s681, 3
        %s683 = scalar_select %p682, %s681, 3
        %s684 = smul.addr %s683, 8
        %s685 = scalar_lea.vmem %s7, %s684
        // Predicated region
        $region61: #{net_forward.1} parent=47 // pred_check
          %p686 = pneg %p190
        $region62: #{net_forward.1} parent=47 // pred_check_branch
          %688 = sbr.rel (%p686) target = $region64
        $region63: #{net_forward.1} parent=47 // pred_region
          %s689 = smul.u32 2, %s20
        $region64: #{net_forward.1} parent=47 // pred_fallthru
          _
      $region48: #{net_forward.1} parent=5 // pred_fallthru
        _
      %p690 = scmp.le.s32.totalorder 2, %s15
      // Predicated region
      $region65: #{net_forward.1} parent=5 // pred_check
        %p691 = pneg %p690
      $region66: #{net_forward.1} parent=5 // pred_check_branch
        %693 = sbr.rel (%p691) target = $region68
      $region67: #{net_forward.1} parent=5 // pred_region
        %s694 = ssub.s32 %s15, 2
        // Predicated region
        $region69: #{net_forward.1} parent=67 // pred_check
          %p695 = pneg %p196
        $region70: #{net_forward.1} parent=67 // pred_check_branch
          %697 = sbr.rel (%p695) target = $region72
        $region71: #{net_forward.1} parent=67 // pred_region
          %s698 = smul.u32 2, %s21
          %p699 = scmp.lt.s32.totalorder %s698, 3
          %s700 = scalar_select %p699, %s698, 3
          %s701 = smul.addr %s700, 8
          %s702 = scalar_lea.vmem %s7, %s701
        $region72: #{net_forward.1} parent=67 // pred_fallthru
          _
      $region68: #{net_forward.1} parent=5 // pred_fallthru
        _
    $region6: #{net_forward.1} parent=1 // loop_footer
      %s19 = sadd.s32 1, %s15
    $region7: #{net_forward.1} parent=1 // loop_footer_branch
      %14 = sbr.rel target = $region3
    $region8: #{net_forward.1} parent=1 // loop_exit
      _
    %703 = vsyncpa [#allocation3], 1
    %s704 = scalar_lea.sflag [#allocation3], 1
    %705 = vsyncpa %s704, 1
    %706 = vsyncpa [#allocation5], 1

</llo_original>
